<compile_context>
chip_gen: v7x
topology: tpu7x:2x2x1
jax: 0.10.0
libtpu: 0.0.40
codegen_flags: <defaults>
</compile_context>

<pallas_src>
import jax
import jax.numpy as jnp
from jax.experimental import pallas as pl
from jax.experimental.pallas import tpu as pltpu  # noqa: F401  (imported per convention)

# ---- DeConvBlock config (defaults: pad_type='Zero', use_bn=True, batchnorm, leakyrelu, bias=False)
N, CI, L = 2, 4, 16            # batch, in-channels, input length
CO, KS, STRIDE = 8, 4, 2       # out-channels, kernel size, stride
OUTPUT_PAD = 0
PAD = KS // 2 // STRIDE        # module's default pad rule -> 1
L_OUT = (L - 1) * STRIDE - 2 * PAD + KS + OUTPUT_PAD   # 32
NL = N * L                     # flattened (batch, time) free (lane) dim of the matmul
BN_EPS = 1e-5
NEG_SLOPE = 0.2

# The polyphase weight layout below is specialized to the module defaults.
assert STRIDE == 2 and KS == 4 and OUTPUT_PAD == 0 and PAD == 1

# Packed-slab geometry (all offsets sublane-tile aligned: multiples of 8 rows).
K_PAD = 16                     # contraction dim: 3*CI = 12, padded to 16
ROWS = K_PAD + 2 * CO          # 32 slab rows:  [ rhs block | param block ]
COLS = NL                      # 32 slab cols
assert COLS >= K_PAD + 2       # param block needs K_PAD weight cols + gamma + beta


def deconv_block_kernel(slab_ref, o_ref):
    # slab_ref: (ROWS, COLS) packed input (single DMA):
    #   rows [0, K_PAD)        : RHS = [x_m ; x_prev ; x_next ; 0-pad]          (contraction)
    #   rows [K_PAD, K_PAD+2CO): cols [0,K_PAD) = polyphase W (even rows | odd rows),
    #                            col K_PAD = gamma (phase-tiled), col K_PAD+1 = beta.
    # o_ref: (2*CO, NL) — matmul's natural layout; row p*CO+o, col n*L+m -> y[n, o, 2m+p].
    slab = slab_ref[...]
    rhs = slab[0:K_PAD, :]                                       # (K_PAD, NL)
    par = slab[K_PAD:K_PAD + 2 * CO, :]                          # (2*CO, COLS)
    w = par[:, 0:K_PAD]                                          # (2*CO, K_PAD)
    gamma = par[:, K_PAD:K_PAD + 1]                              # (2*CO, 1)
    beta = par[:, K_PAD + 1:K_PAD + 2]                           # (2*CO, 1)

    # One MXU contraction: all kernel taps, both output phases.
    res = jnp.dot(w, rhs, preferred_element_type=jnp.float32)    # (2*CO, NL)

    # BatchNorm1d, training mode: biased batch stats per channel over (N, L_OUT).
    # Two-pass (mean, then centered variance) for better conditioning.
    inv_cnt = 1.0 / float(N * L_OUT)
    s1 = jnp.sum(res, axis=1, keepdims=True)                     # (2*CO, 1)
    mean_h = (s1[:CO] + s1[CO:]) * inv_cnt                       # (CO, 1)  aligned 8-row slices
    mean = jnp.concatenate([mean_h, mean_h], axis=0)             # (2*CO, 1) aligned 8+8 concat
    cen = res - mean
    s2 = jnp.sum(cen * cen, axis=1, keepdims=True)               # (2*CO, 1)
    var_h = (s2[:CO] + s2[CO:]) * inv_cnt
    var = jnp.concatenate([var_h, var_h], axis=0)                # (2*CO, 1)

    scale = gamma * jax.lax.rsqrt(var + BN_EPS)                  # gamma / sqrt(var+eps)
    y = cen * scale + beta                                       # fused BN affine
    o_ref[...] = jnp.where(y > 0, y, NEG_SLOPE * y)              # LeakyReLU(0.2), single store


@jax.jit
def deconv_block(x, w, gamma, beta):
    f32 = jnp.float32

    # --- input prep (tiny, fuses into one XLA fusion under jit) -------------------------
    # Channel-major x with flattened (batch, time) lanes, plus its +-1 time shifts
    # (zero-padded per batch element so shifts never leak across batch boundaries).
    xc = jnp.asarray(x, f32).transpose(1, 0, 2)                          # (CI, N, L)
    x_prev = jnp.pad(xc, ((0, 0), (0, 0), (1, 0)))[:, :, :L]             # x[n, :, m-1]
    x_next = jnp.pad(xc, ((0, 0), (0, 0), (0, 1)))[:, :, 1:]             # x[n, :, m+1]
    rhs = jnp.concatenate(
        [xc, x_prev, x_next, jnp.zeros((K_PAD - 3 * CI, N, L), f32)], axis=0
    ).reshape(K_PAD, NL)                                                 # (K_PAD, NL)

    # PyTorch ConvTranspose1d weight (C_in, C_out, KS) -> dense polyphase matrix:
    #   even-t rows: [w_k1, w_k3, 0, pad] ; odd-t rows: [w_k2, 0, w_k0, pad]
    wT = jnp.asarray(w, f32).transpose(1, 0, 2)                          # (CO, CI, KS)
    z = jnp.zeros((CO, CI), f32)
    zp = jnp.zeros((CO, K_PAD - 3 * CI), f32)
    w_even = jnp.concatenate([wT[:, :, 1], wT[:, :, 3], z, zp], axis=1)  # (CO, K_PAD)
    w_odd = jnp.concatenate([wT[:, :, 2], z, wT[:, :, 0], zp], axis=1)   # (CO, K_PAD)
    w_blk = jnp.concatenate([w_even, w_odd], axis=0)                     # (2*CO, K_PAD)

    # gamma/beta pre-tiled to the (2*CO, 1) phase-stacked channel layout.
    g2 = jnp.tile(jnp.asarray(gamma, f32).reshape(CO, 1), (2, 1))        # (2*CO, 1)
    b2 = jnp.tile(jnp.asarray(beta, f32).reshape(CO, 1), (2, 1))         # (2*CO, 1)
    params = jnp.concatenate(
        [w_blk, g2, b2, jnp.zeros((2 * CO, COLS - K_PAD - 2), f32)], axis=1
    )                                                                    # (2*CO, COLS)

    slab = jnp.concatenate([rhs, params], axis=0)                        # (ROWS, COLS)

    # --- single-invocation kernel (no grid: 2 KiB of output, minimal fixed overhead) ----
    out2 = pl.pallas_call(
        deconv_block_kernel,
        out_shape=jax.ShapeDtypeStruct((2 * CO, NL), jnp.float32),
    )(slab)

    # Phase interleave back to (N, CO, L_OUT): row p*CO+o, col n*L+m  ->  y[n, o, 2m+p].
    return out2.reshape(2, CO, N, L).transpose(2, 1, 3, 0).reshape(N, CO, L_OUT)


def reference(x, w, gamma, beta):
    """Pure-JAX reference for the same forward pass (ConvT -> BN(train) -> LeakyReLU)."""
    w_t = jnp.flip(w, axis=-1).transpose(1, 0, 2)                        # (CO, CI, KS)
    y = jax.lax.conv_general_dilated(
        x, w_t, window_strides=(1,),
        padding=[(KS - 1 - PAD, KS - 1 - PAD + OUTPUT_PAD)],
        lhs_dilation=(STRIDE,),
        dimension_numbers=('NCH', 'OIH', 'NCH'))
    mean = jnp.mean(y, axis=(0, 2), keepdims=True)
    var = jnp.mean((y - mean) ** 2, axis=(0, 2), keepdims=True)
    yh = (y - mean) / jnp.sqrt(var + BN_EPS)
    yh = yh * gamma.reshape(1, CO, 1) + beta.reshape(1, CO, 1)
    return jnp.where(yh > 0, yh, NEG_SLOPE * yh)


if __name__ == "__main__":
    key = jax.random.PRNGKey(0)
    kx, kw, kg, kb = jax.random.split(key, 4)

    x = jax.random.normal(kx, (N, CI, L), jnp.float32)

    # Deterministic ConvTranspose1d weight init (shape (C_in, C_out, KS), bias=False).
    fan = CI * KS
    bound = 1.0 / (fan ** 0.5)
    w = jax.random.uniform(kw, (CI, CO, KS), jnp.float32, -bound, bound)

    # BatchNorm1d affine params (non-trivial values to exercise the scale/shift path).
    gamma = jax.random.uniform(kg, (CO,), jnp.float32, 0.5, 1.5)
    beta = 0.1 * jax.random.normal(kb, (CO,), jnp.float32)

    out = jax.block_until_ready(deconv_block(x, w, gamma, beta))
    ref = reference(x, w, gamma, beta)

    assert out.shape == (N, CO, L_OUT), out.shape
    assert jnp.allclose(out, ref, atol=1e-4, rtol=1e-4), float(jnp.max(jnp.abs(out - ref)))
    print("KERNEL_OK")
</pallas_src>

<mosaic_0001>
module attributes {stable_mosaic.version = 11 : i64} {
  func.func @deconv_block_kernel(%arg0: memref<32x32xf32, #tpu.memory_space<vmem>>, %arg1: memref<16x32xf32, #tpu.memory_space<vmem>>) attributes {dimension_semantics = [], scalar_prefetch = 0 : i64, scratch_operands = 0 : i64, tpu.core_type = #tpu.core_type<tc>} {
    %c0 = arith.constant 0 : index
    %c0_0 = arith.constant 0 : index
    %0 = vector.load %arg0[%c0, %c0_0] : memref<32x32xf32, #tpu.memory_space<vmem>>, vector<32x32xf32>
    %1 = vector.extract_strided_slice %0 {offsets = [0, 0], sizes = [16, 32], strides = [1, 1]} : vector<32x32xf32> to vector<16x32xf32>
    %2 = vector.extract_strided_slice %0 {offsets = [16, 0], sizes = [16, 32], strides = [1, 1]} : vector<32x32xf32> to vector<16x32xf32>
    %3 = vector.extract_strided_slice %2 {offsets = [0, 0], sizes = [16, 16], strides = [1, 1]} : vector<16x32xf32> to vector<16x16xf32>
    %4 = vector.extract_strided_slice %2 {offsets = [0, 16], sizes = [16, 1], strides = [1, 1]} : vector<16x32xf32> to vector<16x1xf32>
    %5 = vector.extract_strided_slice %2 {offsets = [0, 17], sizes = [16, 1], strides = [1, 1]} : vector<16x32xf32> to vector<16x1xf32>
    %cst = arith.constant dense<0.000000e+00> : vector<16x32xf32>
    %6 = tpu.matmul %3, %1, %cst {dimension_numbers = #tpu.dot_dimension_numbers<[1], [0], [0], [1], [0, 0, 1, 1], [], []>} : vector<16x16xf32>, vector<16x32xf32>, vector<16x32xf32> -> vector<16x32xf32>
    %cst_1 = arith.constant dense<0.000000e+00> : vector<16xf32>
    %7 = vector.multi_reduction <add>, %6, %cst_1 [1] : vector<16x32xf32> to vector<16xf32>
    %8 = vector.shape_cast %7 : vector<16xf32> to vector<16x1xf32>
    %9 = vector.extract_strided_slice %8 {offsets = [0, 0], sizes = [8, 1], strides = [1, 1]} : vector<16x1xf32> to vector<8x1xf32>
    %10 = vector.extract_strided_slice %8 {offsets = [8, 0], sizes = [8, 1], strides = [1, 1]} : vector<16x1xf32> to vector<8x1xf32>
    %11 = arith.addf %9, %10 : vector<8x1xf32>
    %cst_2 = arith.constant 1.562500e-02 : f32
    %12 = vector.broadcast %cst_2 : f32 to vector<8x1xf32>
    %13 = arith.mulf %11, %12 : vector<8x1xf32>
    %14 = tpu.concatenate %13, %13 in 0 : vector<8x1xf32>, vector<8x1xf32> -> vector<16x1xf32>
    %15 = vector.broadcast %14 : vector<16x1xf32> to vector<16x32xf32>
    %16 = arith.subf %6, %15 : vector<16x32xf32>
    %17 = arith.mulf %16, %16 : vector<16x32xf32>
    %cst_3 = arith.constant dense<0.000000e+00> : vector<16xf32>
    %18 = vector.multi_reduction <add>, %17, %cst_3 [1] : vector<16x32xf32> to vector<16xf32>
    %19 = vector.shape_cast %18 : vector<16xf32> to vector<16x1xf32>
    %20 = vector.extract_strided_slice %19 {offsets = [0, 0], sizes = [8, 1], strides = [1, 1]} : vector<16x1xf32> to vector<8x1xf32>
    %21 = vector.extract_strided_slice %19 {offsets = [8, 0], sizes = [8, 1], strides = [1, 1]} : vector<16x1xf32> to vector<8x1xf32>
    %22 = arith.addf %20, %21 : vector<8x1xf32>
    %cst_4 = arith.constant 1.562500e-02 : f32
    %23 = vector.broadcast %cst_4 : f32 to vector<8x1xf32>
    %24 = arith.mulf %22, %23 : vector<8x1xf32>
    %25 = tpu.concatenate %24, %24 in 0 : vector<8x1xf32>, vector<8x1xf32> -> vector<16x1xf32>
    %cst_5 = arith.constant 9.99999974E-6 : f32
    %26 = vector.broadcast %cst_5 : f32 to vector<16x1xf32>
    %27 = arith.addf %25, %26 : vector<16x1xf32>
    %28 = math.rsqrt %27 : vector<16x1xf32>
    %29 = arith.mulf %4, %28 : vector<16x1xf32>
    %30 = vector.broadcast %29 : vector<16x1xf32> to vector<16x32xf32>
    %31 = arith.mulf %16, %30 : vector<16x32xf32>
    %32 = vector.broadcast %5 : vector<16x1xf32> to vector<16x32xf32>
    %33 = arith.addf %31, %32 : vector<16x32xf32>
    %cst_6 = arith.constant 0.000000e+00 : f32
    %34 = vector.broadcast %cst_6 : f32 to vector<16x32xf32>
    %35 = arith.cmpf ogt, %33, %34 : vector<16x32xf32>
    %cst_7 = arith.constant 2.000000e-01 : f32
    %36 = vector.broadcast %cst_7 : f32 to vector<16x32xf32>
    %37 = arith.mulf %36, %33 : vector<16x32xf32>
    %38 = arith.select %35, %33, %37 : vector<16x32xi1>, vector<16x32xf32>
    %c0_8 = arith.constant 0 : index
    %c0_9 = arith.constant 0 : index
    %39 = vector.load %arg1[%c0_8, %c0_9] : memref<16x32xf32, #tpu.memory_space<vmem>>, vector<16x32xf32>
    tpu.vector_store %arg1[%c0_8, %c0_9], %38 {strides = array<i32>} : memref<16x32xf32, #tpu.memory_space<vmem>>, vector<16x32xf32>,
    return
  }
}

</mosaic_0001>

<llo_original>
// kernel: deconv_block.1
$region0: #{deconv_block.1}
  #allocation0 [shape = 'u32[]', space=smem, size = 0x4, offset = 0x4, fixed_abs, tag = 'smem constant byte address 0x4 - core index']
  #allocation1 [shape = 'u32[144,128]{1,0:T(1,128)}', space=vmem, size = 0x12000, scoped, tag = 'internal scratch']
  %s0 = inlined_call_operand.vmem [shape: f32[32,32], index: 0, kind: input, shape index: {}]
  %s1 = inlined_call_operand.vmem [shape: f32[16,32], index: 1, kind: output, shape index: {}]
  %s2 = sld [smem:[#allocation0]]
  $region14: #{deconv_block.1} parent=0
    _
  %s4 = ssub.s32 1, %s2
  %s5 = scalar_select 0, %s4, %s2
  // Predicated region
  $region2: #{deconv_block.1} parent=0 // pred_check
    _
  $region3: #{deconv_block.1} parent=0 // pred_check_branch
    %7 = sbr.rel (0) target = $region5
  $region4: #{deconv_block.1} parent=0 // pred_region
    _
  $region5: #{deconv_block.1} parent=0 // pred_fallthru
    _
  %v8 = vld [vmem:[%s0] sm:$0xff]
  %v9 = vld [vmem:[%s0 + $0x8] sm:$0xff]
  %v10 = vld [vmem:[%s0 + $0x10] sm:$0xff]
  %v11 = vld [vmem:[%s0 + $0x18] sm:$0xff]
  %vm12 = vcmask 130048
  %v14 = vsel %vm12, %v10, 0
  %v17 = vsel %vm12, %v11, 0
  %19 = vmatprep.subr.mxu0 0.0
  %20 = vmatpush1.msra.mxu0 %v8
  %21 = vmatprep.subr.mxu0 0.0
  %22 = vmatpush1.msra.mxu0 %v9
  %23 = vmatprep.subr.mxu0 0.0
  %24 = vmatpush1.msra.mxu0 0.0
  %25 = vmatprep.subr.mxu0 0.0
  %26 = vmatpush1.msra.mxu0 0.0
  %27 = vmatprep.subr.mxu0 0.0
  %28 = vmatpush1.msra.mxu0 0.0
  %29 = vmatprep.subr.mxu0 0.0
  %30 = vmatpush1.msra.mxu0 0.0
  %31 = vmatprep.subr.mxu0 0.0
  %32 = vmatpush1.msra.mxu0 0.0
  %33 = vmatprep.subr.mxu0 0.0
  %34 = vmatpush1.msra.mxu0 0.0
  %35 = vmatprep.subr.mxu0 0.0
  %36 = vmatpush1.msra.mxu0 0.0
  %37 = vmatprep.subr.mxu0 0.0
  %38 = vmatpush1.msra.mxu0 0.0
  %39 = vmatprep.subr.mxu0 0.0
  %40 = vmatpush1.msra.mxu0 0.0
  %41 = vmatprep.subr.mxu0 0.0
  %42 = vmatpush1.msra.mxu0 0.0
  %43 = vmatprep.subr.mxu0 0.0
  %44 = vmatpush1.msra.mxu0 0.0
  %45 = vmatprep.subr.mxu0 0.0
  %46 = vmatpush1.msra.mxu0 0.0
  %47 = vmatprep.subr.mxu0 0.0
  %48 = vmatpush1.msra.mxu0 0.0
  %49 = vmatprep.subr.mxu0 0.0
  %50 = vmatpush1.msra.mxu0 0.0
  %51 = vmatprep.subr.mxu0 0.0
  %52 = vmatpush1.msra.mxu0 0.0
  %53 = vmatprep.subr.mxu0 0.0
  %54 = vmatpush1.msra.mxu0 0.0
  %55 = vmatprep.subr.mxu0 0.0
  %56 = vmatpush1.msra.mxu0 0.0
  %57 = vmatprep.subr.mxu0 0.0
  %58 = vmatpush1.msra.mxu0 0.0
  %59 = vmatprep.subr.mxu0 0.0
  %60 = vmatpush1.msra.mxu0 0.0
  %61 = vmatprep.subr.mxu0 0.0
  %62 = vmatpush1.msra.mxu0 0.0
  %63 = vmatprep.subr.mxu0 0.0
  %64 = vmatpush1.msra.mxu0 0.0
  %65 = vmatprep.subr.mxu0 0.0
  %66 = vmatpush1.msra.mxu0 0.0
  %67 = vmatprep.subr.mxu0 0.0
  %68 = vmatpush1.msra.mxu0 0.0
  %69 = vmatprep.subr.mxu0 0.0
  %70 = vmatpush1.msra.mxu0 0.0
  %71 = vmatprep.subr.mxu0 0.0
  %72 = vmatpush1.msra.mxu0 0.0
  %73 = vmatprep.subr.mxu0 0.0
  %74 = vmatpush1.msra.mxu0 0.0
  %75 = vmatprep.subr.mxu0 0.0
  %76 = vmatpush1.msra.mxu0 0.0
  %77 = vmatprep.subr.mxu0 0.0
  %78 = vmatpush1.msra.mxu0 0.0
  %79 = vmatprep.subr.mxu0 0.0
  %80 = vmatpush1.msra.mxu0 0.0
  %81 = vmatprep.subr.mxu0 0.0
  %82 = vmatpush1.msra.mxu0 0.0
  %83 = vmatprep.mubr.f32.mxu0 0.0
  %84 = vmatmul.mubr.f32.gmra.mrb[0].mxu0 %v14
  %v85 = vpop.f32.mrb[0].mxu0
  %v86 = vadd.f32 0.0, %v85
  %v87 = vpop.f32.mrb[0].mxu0
  %88 = vmatprep.mubr.f32.mxu0 0.0
  %89 = vmatmul.mubr.f32.gmra.mrb[0].mxu0 %v17
  %v90 = vpop.f32.mrb[0].mxu0
  %v91 = vadd.f32 0.0, %v90
  %v92 = vpop.f32.mrb[0].mxu0
  %93 = vdwg.mxu0
  %vm94 = vcmask 261120
  %v95 = vsel %vm94, %v86, 0.0
  %96 = vadd.xlane.f32.xlu0 %v95
  %v97 = vpop.xlane.xlu0 %96
  %v98 = vsel %vm94, %v91, 0.0
  %99 = vadd.xlane.f32.xlu0 %v98
  %v100 = vpop.xlane.xlu0 %99
  %v101 = vadd.f32 %v97, %v100
  %v102 = vmul.f32 %v101, 0.015625
  %104 = vset.pattern.permute.xlu0 0
  %105 = vperm.xlu0 %104, %v102
  %v106 = vpop.permute.xlu0 %105
  %v108 = vsub.f32 %v86, %v106
  %v109 = vsub.f32 %v91, %v106
  %v110 = vmul.f32 %v108, %v108
  %v111 = vmul.f32 %v109, %v109
  %v112 = vsel %vm94, %v110, 0.0
  %113 = vadd.xlane.f32.xlu0 %v112
  %v114 = vpop.xlane.xlu0 %113
  %v115 = vsel %vm94, %v111, 0.0
  %116 = vadd.xlane.f32.xlu0 %v115
  %v117 = vpop.xlane.xlu0 %116
  %v118 = vadd.f32 %v114, %v117
  %v119 = vmul.f32 %v118, 0.015625
  %v120 = vadd.f32 %v119, 1e-05
  %v121 = vrsqrt.pop %v120
  %123 = vrot.lane.b32.xlu0 %v121, 16
  %v124 = vpop.permute.xlu0 %123
  %v126 = vmul.f32 %v10, %v124
  %v127 = vmul.f32 %v11, %v124
  %129 = vset.pattern.permute.xlu0 16
  %130 = vperm.xlu0 %129, %v126
  %v131 = vpop.permute.xlu0 %130
  %134 = vset.pattern.permute.xlu0 16
  %135 = vperm.xlu0 %134, %v127
  %v136 = vpop.permute.xlu0 %135
  %v138 = vmul.f32 %v108, %v131
  %v139 = vmul.f32 %v109, %v136
  %140 = vset.pattern.permute.xlu0 17
  %141 = vperm.xlu0 %140, %v10
  %v142 = vpop.permute.xlu0 %141
  %144 = vset.pattern.permute.xlu0 17
  %145 = vperm.xlu0 %144, %v11
  %v146 = vpop.permute.xlu0 %145
  %v148 = vadd.f32 %v138, %v142
  %v149 = vadd.f32 %v139, %v146
  %vm150 = vcmp.gt.f32.partialorder %v148, 0.0
  %vm151 = vcmp.gt.f32.partialorder %v149, 0.0
  %v152 = vmul.f32 %v148, 0.2
  %v153 = vmul.f32 %v149, 0.2
  %v154 = vsel %vm150, %v148, %v152
  %v155 = vsel %vm151, %v149, %v153
  %156 = vst.msk [vmem:[%s1] sm:$0xff] %vm94, %v154
  %157 = vst.msk [vmem:[%s1 + $0x8] sm:$0xff] %vm94, %v155
  // Predicated region
  $region6: #{deconv_block.1} parent=0 // pred_check
    _
  $region7: #{deconv_block.1} parent=0 // pred_check_branch
    %159 = sbr.rel (0) target = $region9
  $region8: #{deconv_block.1} parent=0 // pred_region
    _
  $region9: #{deconv_block.1} parent=0 // pred_fallthru
    _
  // Predicated region
  $region10: #{deconv_block.1} parent=0 // pred_check
    _
  $region11: #{deconv_block.1} parent=0 // pred_check_branch
    %161 = sbr.rel (0) target = $region13
  $region12: #{deconv_block.1} parent=0 // pred_region
    _
  $region13: #{deconv_block.1} parent=0 // pred_fallthru
    _

</llo_original>
